<compile_context>
chip_gen: v5e
topology: v5e:2x2
jax: 0.10.0
libtpu: 0.0.40
codegen_flags: <defaults>
</compile_context>

<pallas_src>
import jax
import jax.numpy as jnp
import jax.scipy.linalg as jsl
from jax.experimental import pallas as pl
from jax.experimental.pallas import tpu as pltpu


def _fused_heads_kernel(x_ref, w1_ref, b1_ref, w2_ref, b2_ref, o_ref):
    # x_ref:  (tm, pack*O)          packed row tile (streams across the grid)
    # w1_ref: (pack*O, pack*2H)     fused fc1 weights (resident block)
    # b1_ref: (1, pack*2H)          f32
    # w2_ref: (pack*2H, pack*2O)    fused block-diagonal fc2 weights (resident)
    # b2_ref: (1, pack*2O)          f32
    x = x_ref[...]
    h = jnp.dot(x, w1_ref[...], preferred_element_type=jnp.float32) + b1_ref[...]
    h = jnp.maximum(h, 0.0)                                    # ReLU on the VPU
    out = jnp.dot(h.astype(w2_ref.dtype), w2_ref[...],
                  preferred_element_type=jnp.float32) + b2_ref[...]
    o_ref[...] = out.astype(o_ref.dtype)


def _pack_factor(out_size, target_lanes=128):
    """Rows packed per kernel row so the output tile is `target_lanes` wide."""
    two_o = 2 * out_size
    if two_o >= target_lanes or target_lanes % two_o != 0:
        return 1
    return target_lanes // two_o


def pack_tispell_head_params(c_w1, c_b1, c_w2, c_b2,
                             s_w1, s_b1, s_w2, s_b2,
                             *, pack=None, compute_dtype=None):
    """One-time weight prep (hoisted off the per-token forward path).

    PyTorch nn.Linear layouts: w1 (H, O), b1 (H,), w2 (O, H), b2 (O,).
    Use compute_dtype=jnp.bfloat16 on v6e/v7x (f32 accumulation is kept).
    """
    H, O = c_w1.shape
    if pack is None:
        pack = _pack_factor(O)
    cd = compute_dtype or c_w1.dtype

    # Head fusion: one (O, 2H) fc1 operand + block-diagonal (2H, 2O) fc2 operand.
    w1_cat = jnp.concatenate([c_w1.T, s_w1.T], axis=1)          # (O, 2H)
    b1_cat = jnp.concatenate([c_b1, s_b1])                      # (2H,)
    w2_bd = jsl.block_diag(c_w2.T, s_w2.T)                      # (2H, 2O)
    b2_cat = jnp.concatenate([c_b2, s_b2])                      # (2O,)

    # Lane packing: block-diagonal replication so `pack` consecutive rows are
    # computed per kernel row -> lane-dense (128-wide) stores.
    eye = jnp.eye(pack, dtype=w1_cat.dtype)
    w1_big = jnp.kron(eye, w1_cat).astype(cd)                   # (pack*O,  pack*2H)
    w2_big = jnp.kron(eye, w2_bd).astype(cd)                    # (pack*2H, pack*2O)
    b1_big = jnp.tile(b1_cat, pack).reshape(1, -1).astype(jnp.float32)
    b2_big = jnp.tile(b2_cat, pack).reshape(1, -1).astype(jnp.float32)

    return dict(w1=w1_big, b1=b1_big, w2=w2_big, b2=b2_big,
                pack=int(pack), out_size=int(O), hidden_size=int(H),
                compute_dtype=cd)


def tispell_heads_forward(x, params, *, tm_max=4096):
    """Both corrector heads on x: [..., O] -> (logit_s, logit_c), each [..., O]."""
    # TODO(synk): for tiny problems, gate to a plain XLA fusion (the custom
    # call's fixed DMA/grid cost dominates there); always-Pallas here.
    O = params["out_size"]
    P = params["pack"]
    cd = params["compute_dtype"]
    orig_shape = x.shape
    assert orig_shape[-1] == O, "last dim must be the head output_size"

    x2 = x.reshape(-1, O)
    M = x2.shape[0]
    d_in = P * O
    d_hid = params["w1"].shape[1]
    d_out = P * 2 * O

    # Row-tile selection: single grid step whenever it fits (v5e/v6e are
    # single-TC, the grid is a sequential loop); otherwise large tiles that
    # amortize the ~0.35us/step overhead, sized well inside a 32 MiB VMEM
    # budget (safe on v7x's 64 MiB physical / 32 MiB scoped default).
    tm_max = max(8, (tm_max // 8) * 8)
    Mp = ((M + P - 1) // P) * P            # align to the pack factor
    M_packed = Mp // P
    if M_packed <= tm_max:
        tm = M_packed                      # block == full array: no 8-row padding
        grid_m = 1
    else:
        tm = tm_max
        grid_m = pl.cdiv(M_packed, tm)
        M_packed = grid_m * tm
        Mp = M_packed * P
    if Mp != M:
        # TODO(synk): mask the ragged last tile in-kernel instead of padding.
        x2 = jnp.pad(x2, ((0, Mp - M), (0, 0)))

    x_packed = x2.reshape(M_packed, d_in).astype(cd)

    isz = jnp.dtype(cd).itemsize
    cost = pl.CostEstimate(
        flops=2 * M_packed * (d_in * d_hid + d_hid * d_out),
        transcendentals=0,
        bytes_accessed=M_packed * (d_in + d_out) * isz
        + (params["w1"].size + params["w2"].size) * isz
        + (params["b1"].size + params["b2"].size) * 4,
    )

    out = pl.pallas_call(
        _fused_heads_kernel,
        out_shape=jax.ShapeDtypeStruct((M_packed, d_out), x.dtype),
        grid_spec=pltpu.PrefetchScalarGridSpec(
            num_scalar_prefetch=0,
            grid=(grid_m,),
            in_specs=[
                pl.BlockSpec((tm, d_in), lambda i: (i, 0)),     # x tile (streams)
                pl.BlockSpec((d_in, d_hid), lambda i: (0, 0)),  # fused W1 (resident)
                pl.BlockSpec((1, d_hid), lambda i: (0, 0)),     # fused b1
                pl.BlockSpec((d_hid, d_out), lambda i: (0, 0)), # fused W2 (resident)
                pl.BlockSpec((1, d_out), lambda i: (0, 0)),     # fused b2
            ],
            out_specs=pl.BlockSpec((tm, d_out), lambda i: (i, 0)),
        ),
        compiler_params=pltpu.CompilerParams(
            # "parallel" is harmless on single-TC v5e/v6e and lets v7x shard
            # the independent row-tile axis across its two TensorCores.
            dimension_semantics=("parallel",),
            vmem_limit_bytes=32 * 1024 * 1024,
        ),
        cost_estimate=cost,
    )(x_packed, params["w1"], params["b1"], params["w2"], params["b2"])

    out = out.reshape(Mp, 2 * O)
    if Mp != M:
        out = out[:M]
    logit_c = out[:, :O].reshape(orig_shape)
    logit_s = out[:, O:].reshape(orig_shape)
    return logit_s, logit_c                 # module returns (logit_s, logit_c)


if __name__ == "__main__":
    # Small shapes consistent with the module: DownStreamer(vocab, vocab), so
    # hidden_size == output_size == vocab_size; hidden_states are [B, S, vocab].
    batch, seq = 2, 8
    vocab_size = 32
    hidden_size = output_size = vocab_size

    key = jax.random.PRNGKey(0)
    keys = jax.random.split(key, 9)

    # TODO(synk): pretrained RoBERTa backbone not reimplemented; random
    # hidden_states stand in for outputs.logits.
    x = jax.random.normal(keys[0], (batch, seq, output_size), dtype=jnp.float32)

    def init_linear(kw, kb, out_f, in_f):
        lim = 1.0 / (in_f ** 0.5)
        w = jax.random.uniform(kw, (out_f, in_f), jnp.float32, -lim, lim)
        b = jax.random.uniform(kb, (out_f,), jnp.float32, -lim, lim)
        return w, b

    # character_corrector params
    c_w1, c_b1 = init_linear(keys[1], keys[2], hidden_size, output_size)
    c_w2, c_b2 = init_linear(keys[3], keys[4], output_size, hidden_size)
    # syllable_corrector params
    s_w1, s_b1 = init_linear(keys[5], keys[6], hidden_size, output_size)
    s_w2, s_b2 = init_linear(keys[7], keys[8], output_size, hidden_size)

    # One-time fused/lane-packed weight prep (use compute_dtype=jnp.bfloat16 on
    # v6e/v7x for the real model; f32 here for a tight reference comparison).
    params = pack_tispell_head_params(c_w1, c_b1, c_w2, c_b2,
                                      s_w1, s_b1, s_w2, s_b2,
                                      compute_dtype=jnp.float32)

    logit, logit_c = tispell_heads_forward(x, params)
    jax.block_until_ready((logit, logit_c))

    # Pure-JAX references for sanity.
    ref_c = jnp.maximum(x @ c_w1.T + c_b1, 0.0) @ c_w2.T + c_b2
    ref_s = jnp.maximum(x @ s_w1.T + s_b1, 0.0) @ s_w2.T + s_b2
    assert logit.shape == (batch, seq, output_size)
    assert logit_c.shape == (batch, seq, output_size)
    assert jnp.allclose(logit_c, ref_c, atol=1e-4, rtol=1e-4)
    assert jnp.allclose(logit, ref_s, atol=1e-4, rtol=1e-4)

    print("KERNEL_OK")
</pallas_src>

<mosaic_0001>
module attributes {stable_mosaic.version = 11 : i64} {
  func.func @_fused_heads_kernel(%arg0: i32, %arg1: memref<8x64xf32, #tpu.memory_space<vmem>>, %arg2: memref<64x128xf32, #tpu.memory_space<vmem>>, %arg3: memref<1x128xf32, #tpu.memory_space<vmem>>, %arg4: memref<128x128xf32, #tpu.memory_space<vmem>>, %arg5: memref<1x128xf32, #tpu.memory_space<vmem>>, %arg6: memref<8x128xf32, #tpu.memory_space<vmem>>) attributes {dimension_semantics = [#tpu.dimension_semantics<parallel>], iteration_bounds = array<i64: 1>, scalar_prefetch = 0 : i64, scratch_operands = 0 : i64, tpu.core_type = #tpu.core_type<tc>, window_params = [{transform_indices = @transform_0, window_bounds = array<i64: 8, 64>}, {pipeline_mode = #tpu.pipeline_mode<synchronous>, transform_indices = @transform_1, window_bounds = array<i64: 64, 128>}, {pipeline_mode = #tpu.pipeline_mode<synchronous>, transform_indices = @transform_2, window_bounds = array<i64: 1, 128>}, {pipeline_mode = #tpu.pipeline_mode<synchronous>, transform_indices = @transform_3, window_bounds = array<i64: 128, 128>}, {pipeline_mode = #tpu.pipeline_mode<synchronous>, transform_indices = @transform_4, window_bounds = array<i64: 1, 128>}, {transform_indices = @transform_5, window_bounds = array<i64: 8, 128>}]} {
    %c0 = arith.constant 0 : index
    %c0_0 = arith.constant 0 : index
    %0 = vector.load %arg1[%c0, %c0_0] : memref<8x64xf32, #tpu.memory_space<vmem>>, vector<8x64xf32>
    %c0_1 = arith.constant 0 : index
    %c0_2 = arith.constant 0 : index
    %1 = vector.load %arg2[%c0_1, %c0_2] : memref<64x128xf32, #tpu.memory_space<vmem>>, vector<64x128xf32>
    %cst = arith.constant dense<0.000000e+00> : vector<8x128xf32>
    %2 = tpu.matmul %0, %1, %cst {dimension_numbers = #tpu.dot_dimension_numbers<[1], [0], [0], [1], [0, 0, 1, 1], [], []>} : vector<8x64xf32>, vector<64x128xf32>, vector<8x128xf32> -> vector<8x128xf32>
    %c0_3 = arith.constant 0 : index
    %c0_4 = arith.constant 0 : index
    %3 = vector.load %arg3[%c0_3, %c0_4] : memref<1x128xf32, #tpu.memory_space<vmem>>, vector<1x128xf32>
    %4 = vector.broadcast %3 : vector<1x128xf32> to vector<8x128xf32>
    %5 = arith.addf %2, %4 : vector<8x128xf32>
    %cst_5 = arith.constant 0.000000e+00 : f32
    %6 = vector.broadcast %cst_5 : f32 to vector<8x128xf32>
    %7 = arith.maximumf %5, %6 : vector<8x128xf32>
    %c0_6 = arith.constant 0 : index
    %c0_7 = arith.constant 0 : index
    %8 = vector.load %arg4[%c0_6, %c0_7] : memref<128x128xf32, #tpu.memory_space<vmem>>, vector<128x128xf32>
    %cst_8 = arith.constant dense<0.000000e+00> : vector<8x128xf32>
    %9 = tpu.matmul %7, %8, %cst_8 {dimension_numbers = #tpu.dot_dimension_numbers<[1], [0], [0], [1], [0, 0, 1, 1], [], []>} : vector<8x128xf32>, vector<128x128xf32>, vector<8x128xf32> -> vector<8x128xf32>
    %c0_9 = arith.constant 0 : index
    %c0_10 = arith.constant 0 : index
    %10 = vector.load %arg5[%c0_9, %c0_10] : memref<1x128xf32, #tpu.memory_space<vmem>>, vector<1x128xf32>
    %11 = vector.broadcast %10 : vector<1x128xf32> to vector<8x128xf32>
    %12 = arith.addf %9, %11 : vector<8x128xf32>
    %c0_11 = arith.constant 0 : index
    %c0_12 = arith.constant 0 : index
    %13 = vector.load %arg6[%c0_11, %c0_12] : memref<8x128xf32, #tpu.memory_space<vmem>>, vector<8x128xf32>
    tpu.vector_store %arg6[%c0_11, %c0_12], %12 {strides = array<i32>} : memref<8x128xf32, #tpu.memory_space<vmem>>, vector<8x128xf32>,
    return
  }
  func.func @transform_0(%arg0: i32) -> (i32, i32) {
    %c0_i32 = arith.constant 0 : i32
    %c0_i32_0 = arith.constant 0 : i32
    return %arg0, %c0_i32 : i32, i32
  }
  func.func @transform_1(%arg0: i32) -> (i32, i32) {
    %c0_i32 = arith.constant 0 : i32
    %c0_i32_0 = arith.constant 0 : i32
    %c0_i32_1 = arith.constant 0 : i32
    return %c0_i32, %c0_i32_0 : i32, i32
  }
  func.func @transform_2(%arg0: i32) -> (i32, i32) {
    %c0_i32 = arith.constant 0 : i32
    %c0_i32_0 = arith.constant 0 : i32
    %c0_i32_1 = arith.constant 0 : i32
    return %c0_i32, %c0_i32_0 : i32, i32
  }
  func.func @transform_3(%arg0: i32) -> (i32, i32) {
    %c0_i32 = arith.constant 0 : i32
    %c0_i32_0 = arith.constant 0 : i32
    %c0_i32_1 = arith.constant 0 : i32
    return %c0_i32, %c0_i32_0 : i32, i32
  }
  func.func @transform_4(%arg0: i32) -> (i32, i32) {
    %c0_i32 = arith.constant 0 : i32
    %c0_i32_0 = arith.constant 0 : i32
    %c0_i32_1 = arith.constant 0 : i32
    return %c0_i32, %c0_i32_0 : i32, i32
  }
  func.func @transform_5(%arg0: i32) -> (i32, i32) {
    %c0_i32 = arith.constant 0 : i32
    %c0_i32_0 = arith.constant 0 : i32
    return %arg0, %c0_i32 : i32, i32
  }
}

</mosaic_0001>

<llo_original>
// kernel: tpu_custom_call.1
$region0: #{tpu_custom_call.1}
  #allocation0 [shape = 'u32[]', space=smem, size = 0x4, offset = 0x4, fixed_abs, tag = 'smem constant byte address 0x4 - core index']
  #allocation1 [shape = 'u32[72,128]{1,0:T(1,128)}', space=vmem, size = 0x9000, scoped, tag = 'internal scratch']
  %s0 = inlined_call_operand.hbm [shape: f32[8,64], index: 0, kind: input, shape index: {}]
  %s1 = inlined_call_operand.hbm [shape: f32[64,128], index: 1, kind: input, shape index: {}]
  %s2 = inlined_call_operand.vmem [shape: f32[1,128], index: 2, kind: input, shape index: {}]
  %s3 = inlined_call_operand.hbm [shape: f32[128,128], index: 3, kind: input, shape index: {}]
  %s4 = inlined_call_operand.vmem [shape: f32[1,128], index: 4, kind: input, shape index: {}]
  %s5 = inlined_call_operand.hbm [shape: f32[8,128], index: 5, kind: output, shape index: {}]
  %s6 = sld [smem:[#allocation0]]
  $region42: #{tpu_custom_call.1} parent=0
    _
  %s8 = ssub.s32 1, %s6
  %s9 = scalar_select 0, %s8, %s6
  $region1: #{tpu_custom_call.1} parent=0
    #allocation2 [shape = 'u8[4096]{0}', space=vmem, size = 0x1000, scoped, tag = 'input window, operand 0, single buffered']
    #allocation3 [shape = 's32[1]{0}', space=sflag, size = 0x4, scoped, tag = 'scoped memory for tpu_custom_call.1']
    #allocation4 [shape = 's32[1]{0}', space=sflag, size = 0x4, scoped, tag = 'scoped memory for tpu_custom_call.1']
    #allocation5 [shape = 'u8[32768]{0}', space=vmem, size = 0x8000, scoped, tag = 'input window, operand 1, single buffered']
    #allocation6 [shape = 's32[1]{0}', space=sflag, size = 0x4, scoped, tag = 'scoped memory for tpu_custom_call.1']
    #allocation7 [shape = 'u8[65536]{0}', space=vmem, size = 0x10000, scoped, tag = 'input window, operand 3, single buffered']
    #allocation8 [shape = 'u8[4096]{0}', space=vmem, size = 0x1000, scoped, tag = 'output window, operand 0, single buffered']
    %10 = vsyncpa [#allocation3], 0
    %11 = vsyncpa [#allocation6], 0
    %12 = vsyncpa [#allocation4], 0
    // Predicated region
    $region2: #{tpu_custom_call.1} parent=1 // pred_check
      _
    $region3: #{tpu_custom_call.1} parent=1 // pred_check_branch
      %14 = sbr.rel (0) target = $region5
    $region4: #{tpu_custom_call.1} parent=1 // pred_region
      %16 = vsyncadd [#allocation3], 0
      %s18 = sshll.u32 %s0, 4
      %s19 = int_to_ptr.hbm [resolvable:$true] %s18
      %s20 = sshll.u32 [#allocation2], 4
      %s21 = int_to_ptr.vmem [resolvable:$true] %s20
      %23 = dma.hbm_to_vmem [thread:$0]  %s19, 128, %s21, [#allocation3]
    $region5: #{tpu_custom_call.1} parent=1 // pred_fallthru
      _
    // Predicated region
    $region6: #{tpu_custom_call.1} parent=1 // pred_check
      _
    $region7: #{tpu_custom_call.1} parent=1 // pred_check_branch
      %25 = sbr.rel (0) target = $region9
    $region8: #{tpu_custom_call.1} parent=1 // pred_region
      %27 = vsyncadd [#allocation6], 0
      %s28 = sshll.u32 %s1, 4
      %s29 = int_to_ptr.hbm [resolvable:$true] %s28
      %s30 = sshll.u32 [#allocation5], 4
      %s31 = int_to_ptr.vmem [resolvable:$true] %s30
      %36 = dma.hbm_to_vmem [thread:$0]  %s29, 1024, %s31, [#allocation6], 128, 128, 8
    $region9: #{tpu_custom_call.1} parent=1 // pred_fallthru
      _
    // Predicated region
    $region10: #{tpu_custom_call.1} parent=1 // pred_check
      _
    $region11: #{tpu_custom_call.1} parent=1 // pred_check_branch
      %38 = sbr.rel (0) target = $region13
    $region12: #{tpu_custom_call.1} parent=1 // pred_region
      _
    $region13: #{tpu_custom_call.1} parent=1 // pred_fallthru
      _
    // Predicated region
    $region14: #{tpu_custom_call.1} parent=1 // pred_check
      _
    $region15: #{tpu_custom_call.1} parent=1 // pred_check_branch
      %40 = sbr.rel (0) target = $region17
    $region16: #{tpu_custom_call.1} parent=1 // pred_region
      %42 = vsyncadd [#allocation6], 0
      %s43 = sshll.u32 %s3, 4
      %s44 = int_to_ptr.hbm [resolvable:$true] %s43
      %s45 = sshll.u32 [#allocation7], 4
      %s46 = int_to_ptr.vmem [resolvable:$true] %s45
      %51 = dma.hbm_to_vmem [thread:$0]  %s44, 2048, %s46, [#allocation6], 128, 128, 8
    $region17: #{tpu_custom_call.1} parent=1 // pred_fallthru
      _
    // Predicated region
    $region18: #{tpu_custom_call.1} parent=1 // pred_check
      _
    $region19: #{tpu_custom_call.1} parent=1 // pred_check_branch
      %53 = sbr.rel (0) target = $region21
    $region20: #{tpu_custom_call.1} parent=1 // pred_region
      _
    $region21: #{tpu_custom_call.1} parent=1 // pred_fallthru
      _
    // Predicated region
    $region22: #{tpu_custom_call.1} parent=1 // pred_check
      _
    $region23: #{tpu_custom_call.1} parent=1 // pred_check_branch
      %55 = sbr.rel (0) target = $region25
    $region24: #{tpu_custom_call.1} parent=1 // pred_region
      %57 = dma.done [#allocation3], 128
    $region25: #{tpu_custom_call.1} parent=1 // pred_fallthru
      _
    // Predicated region
    $region26: #{tpu_custom_call.1} parent=1 // pred_check
      _
    $region27: #{tpu_custom_call.1} parent=1 // pred_check_branch
      %59 = sbr.rel (0) target = $region29
    $region28: #{tpu_custom_call.1} parent=1 // pred_region
      %61 = dma.done [#allocation6], 1024
    $region29: #{tpu_custom_call.1} parent=1 // pred_fallthru
      _
    // Predicated region
    $region30: #{tpu_custom_call.1} parent=1 // pred_check
      _
    $region31: #{tpu_custom_call.1} parent=1 // pred_check_branch
      %63 = sbr.rel (0) target = $region33
    $region32: #{tpu_custom_call.1} parent=1 // pred_region
      %65 = dma.done [#allocation6], 2048
    $region33: #{tpu_custom_call.1} parent=1 // pred_fallthru
      _
    %v66 = vld [vmem:[#allocation2] sm:$0xff]
    %v67 = vld [vmem:[#allocation5] sm:$0xff]
    %v68 = vld [vmem:[#allocation5 + $0x8] sm:$0xff]
    %v69 = vld [vmem:[#allocation5 + $0x10] sm:$0xff]
    %v70 = vld [vmem:[#allocation5 + $0x18] sm:$0xff]
    %v71 = vld [vmem:[#allocation5 + $0x20] sm:$0xff]
    %v72 = vld [vmem:[#allocation5 + $0x28] sm:$0xff]
    %v73 = vld [vmem:[#allocation5 + $0x30] sm:$0xff]
    %v74 = vld [vmem:[#allocation5 + $0x38] sm:$0xff]
    %v75 = vld [vmem:[%s2] sm:$0x1]
    %v77 = vperm.slane %v75, 0
    %vm79 = vcmask 523264
    %v81 = vsel %vm79, %v66, 0
    %83 = vmatpush.msra.mxu0 0.0
    %84 = vmatpush.msra.mxu0 0.0
    %85 = vmatpush.msra.mxu0 0.0
    %86 = vmatpush.msra.mxu0 0.0
    %87 = vmatpush.msra.mxu0 0.0
    %88 = vmatpush.msra.mxu0 0.0
    %89 = vmatpush.msra.mxu0 0.0
    %90 = vmatpush.msra.mxu0 0.0
    %91 = vmatpush.msra.mxu0 %v74
    %92 = vmatpush.msra.mxu0 %v73
    %93 = vmatpush.msra.mxu0 %v72
    %94 = vmatpush.msra.mxu0 %v71
    %95 = vmatpush.msra.mxu0 %v70
    %96 = vmatpush.msra.mxu0 %v69
    %97 = vmatpush.msra.mxu0 %v68
    %98 = vmatpush.msra.mxu0 %v67
    %99 = vmatmul.f32.gmra.mxu0 %v81
    %v100 = vpop.f32.mrf.mxu0
    %v101 = vadd.f32 %v77, %v100
    %102 = vdwg.mxu0
    %v103 = vmax.f32 %v101, 0.0
    %v104 = vld [vmem:[#allocation7] sm:$0xff]
    %v105 = vld [vmem:[#allocation7 + $0x8] sm:$0xff]
    %v106 = vld [vmem:[#allocation7 + $0x10] sm:$0xff]
    %v107 = vld [vmem:[#allocation7 + $0x18] sm:$0xff]
    %v108 = vld [vmem:[#allocation7 + $0x20] sm:$0xff]
    %v109 = vld [vmem:[#allocation7 + $0x28] sm:$0xff]
    %v110 = vld [vmem:[#allocation7 + $0x30] sm:$0xff]
    %v111 = vld [vmem:[#allocation7 + $0x38] sm:$0xff]
    %v112 = vld [vmem:[#allocation7 + $0x40] sm:$0xff]
    %v113 = vld [vmem:[#allocation7 + $0x48] sm:$0xff]
    %v114 = vld [vmem:[#allocation7 + $0x50] sm:$0xff]
    %v115 = vld [vmem:[#allocation7 + $0x58] sm:$0xff]
    %v116 = vld [vmem:[#allocation7 + $0x60] sm:$0xff]
    %v117 = vld [vmem:[#allocation7 + $0x68] sm:$0xff]
    %v118 = vld [vmem:[#allocation7 + $0x70] sm:$0xff]
    %v119 = vld [vmem:[#allocation7 + $0x78] sm:$0xff]
    %v120 = vld [vmem:[%s4] sm:$0x1]
    %v122 = vperm.slane %v120, 0
    %124 = vmatpush.msra.mxu0 %v119
    %125 = vmatpush.msra.mxu0 %v118
    %126 = vmatpush.msra.mxu0 %v117
    %127 = vmatpush.msra.mxu0 %v116
    %128 = vmatpush.msra.mxu0 %v115
    %129 = vmatpush.msra.mxu0 %v114
    %130 = vmatpush.msra.mxu0 %v113
    %131 = vmatpush.msra.mxu0 %v112
    %132 = vmatpush.msra.mxu0 %v111
    %133 = vmatpush.msra.mxu0 %v110
    %134 = vmatpush.msra.mxu0 %v109
    %135 = vmatpush.msra.mxu0 %v108
    %136 = vmatpush.msra.mxu0 %v107
    %137 = vmatpush.msra.mxu0 %v106
    %138 = vmatpush.msra.mxu0 %v105
    %139 = vmatpush.msra.mxu0 %v104
    %140 = vmatmul.f32.gmra.mxu0 %v103
    %v141 = vpop.f32.mrf.mxu0
    %v142 = vadd.f32 %v122, %v141
    %143 = vdwg.mxu0
    %144 = vst [vmem:[#allocation8] sm:$0xff] %v142
    // Predicated region
    $region34: #{tpu_custom_call.1} parent=1 // pred_check
      _
    $region35: #{tpu_custom_call.1} parent=1 // pred_check_branch
      %146 = sbr.rel (0) target = $region37
    $region36: #{tpu_custom_call.1} parent=1 // pred_region
      %148 = vsyncadd [#allocation4], 0
      %s150 = sshll.u32 [#allocation8], 4
      %s151 = int_to_ptr.vmem [resolvable:$true] %s150
      %s152 = sshll.u32 %s5, 4
      %s153 = int_to_ptr.hbm [resolvable:$true] %s152
      %155 = dma.vmem_to_hbm [thread:$0]  %s151, 128, %s153, [#allocation4]
    $region37: #{tpu_custom_call.1} parent=1 // pred_fallthru
      _
    // Predicated region
    $region38: #{tpu_custom_call.1} parent=1 // pred_check
      _
    $region39: #{tpu_custom_call.1} parent=1 // pred_check_branch
      %157 = sbr.rel (0) target = $region41
    $region40: #{tpu_custom_call.1} parent=1 // pred_region
      %159 = dma.done [#allocation4], 128
    $region41: #{tpu_custom_call.1} parent=1 // pred_fallthru
      _
    %160 = vsyncpa [#allocation3], 1
    %161 = vsyncpa [#allocation6], 1
    %162 = vsyncpa [#allocation4], 1

</llo_original>
